<compile_context>
chip_gen: v7x
topology: tpu7x:2x2x1
jax: 0.10.0
libtpu: 0.0.40
codegen_flags: <defaults>
</compile_context>

<pallas_src>
import functools

import jax
import jax.numpy as jnp
from jax import lax
from jax.experimental import pallas as pl
from jax.experimental.pallas import tpu as pltpu


def _default_vmem_limit():
    # Generation-aware scoped-VMEM budget: 3/4 of physical VMEM, capped at 96 MiB.
    # v5e/v6e: 128 MiB -> 96 MiB; v7x: 64 MiB -> 48 MiB. Falls back to 48 MiB.
    try:
        cap = int(pltpu.get_tpu_info().vmem_capacity_bytes)
    except Exception:
        cap = 64 * 1024 * 1024
    return int(min(96 * 1024 * 1024, (cap * 3) // 4))


_VMEM_LIMIT = _default_vmem_limit()


def _round_up(x, m):
    return ((x + m - 1) // m) * m


def _tile_and_pad(dim, pref, align):
    """Tile size (multiple of `align`, <= pref) and the dim padded to a multiple of it."""
    t = min(_round_up(dim, align), pref)
    return t, _round_up(dim, t)


def _tile(dim, pref, align):
    """Largest multiple of `align` <= pref that divides dim, else the full dim.

    Only used for *batch* dimensions (bounded, never VMEM-fatal)."""
    t = min(pref, dim)
    t -= t % align
    while t >= align:
        if dim % t == 0:
            return t
        t -= align
    return dim


# ----------------------------- Generic tiled matmul -----------------------------
def _mm_kernel(a_ref, b_ref, o_ref, acc_ref, *, relu):
    @pl.when(pl.program_id(2) == 0)
    def _():
        acc_ref[...] = jnp.zeros_like(acc_ref)

    acc_ref[...] += jnp.dot(a_ref[...], b_ref[...], preferred_element_type=jnp.float32)

    @pl.when(pl.program_id(2) == pl.num_programs(2) - 1)
    def _():
        y = acc_ref[...]
        if relu:
            y = jnp.maximum(y, 0.0)
        o_ref[...] = y.astype(o_ref.dtype)


def _mm_bias_kernel(a_ref, b_ref, bias_ref, o_ref, acc_ref, *, relu):
    @pl.when(pl.program_id(2) == 0)
    def _():
        acc_ref[...] = jnp.zeros_like(acc_ref)

    acc_ref[...] += jnp.dot(a_ref[...], b_ref[...], preferred_element_type=jnp.float32)

    @pl.when(pl.program_id(2) == pl.num_programs(2) - 1)
    def _():
        y = acc_ref[...] + bias_ref[...]
        if relu:
            y = jnp.maximum(y, 0.0)
        o_ref[...] = y.astype(o_ref.dtype)


def tiled_matmul(a, b, bias=None, relu=False, out_dtype=jnp.float32,
                 tm_pref=256, tn_pref=512, tk_pref=1024):
    """C = act(A @ B + bias); bf16 MXU inputs, f32 accumulation, tiled over (M, N, K).

    Dims are zero-padded to multiples of the chosen tile sizes so no dimension
    ever falls back to a single huge VMEM block; padding is sliced off at the end.
    """
    M, K = a.shape
    _, N = b.shape
    # bf16 packs two rows per sublane -> align M tiles to 16 (N/K to the 128 lane axis).
    tm, Mp = _tile_and_pad(M, tm_pref, 16)
    tn, Np = _tile_and_pad(N, tn_pref, 128)
    tk, Kp = _tile_and_pad(K, tk_pref, 128)

    if (Mp, Kp) != (M, K):
        a = jnp.pad(a, ((0, Mp - M), (0, Kp - K)))
    if (Kp, Np) != (K, N):
        b = jnp.pad(b, ((0, Kp - K), (0, Np - N)))

    grid = (Mp // tm, Np // tn, Kp // tk)
    in_specs = [pl.BlockSpec((tm, tk), lambda i, j, k: (i, k)),
                pl.BlockSpec((tk, tn), lambda i, j, k: (k, j))]
    args = [a, b]
    if bias is not None:
        if Np != N:
            bias = jnp.pad(bias, ((0, 0), (0, Np - N)))
        in_specs.append(pl.BlockSpec((1, tn), lambda i, j, k: (0, j)))
        args.append(bias)
        kernel = functools.partial(_mm_bias_kernel, relu=relu)
    else:
        kernel = functools.partial(_mm_kernel, relu=relu)

    out = pl.pallas_call(
        kernel,
        out_shape=jax.ShapeDtypeStruct((Mp, Np), out_dtype),
        grid_spec=pltpu.PrefetchScalarGridSpec(
            num_scalar_prefetch=0, grid=grid,
            in_specs=in_specs,
            out_specs=pl.BlockSpec((tm, tn), lambda i, j, k: (i, j)),
            scratch_shapes=[pltpu.VMEM((tm, tn), jnp.float32)]),
        compiler_params=pltpu.CompilerParams(
            dimension_semantics=("parallel", "parallel", "arbitrary"),
            vmem_limit_bytes=_VMEM_LIMIT),
    )(*args)
    if (Mp, Np) != (M, N):
        out = out[:M, :N]
    return out


# ----------------------------- Image encoder -----------------------------
def _fc_l2norm_kernel(a_ref, w_ref, b_ref, o_ref, acc_ref):
    @pl.when(pl.program_id(1) == 0)
    def _():
        acc_ref[...] = jnp.zeros_like(acc_ref)

    acc_ref[...] += jnp.dot(a_ref[...], w_ref[...], preferred_element_type=jnp.float32)

    @pl.when(pl.program_id(1) == pl.num_programs(1) - 1)
    def _():
        y = acc_ref[...] + b_ref[...]
        # l2norm: x / ||x||_2 (tiny clamp only guards an exactly-zero row; the
        # reference l2norm has no eps).
        ss = jnp.sum(y * y, axis=1, keepdims=True)
        o_ref[...] = y * lax.rsqrt(jnp.maximum(ss, 1e-24))


def image_encoder(imgs, params):
    # TODO(synk): ResNet-152 backbone loaded from a checkpoint file has no Pallas
    # equivalent; replaced by a deterministic linear+ReLU feature extractor that
    # produces the penultimate "fc.in_features" features.
    B = imgs.shape[0]
    x = imgs.reshape(B, -1).astype(jnp.bfloat16)
    wb = params["img_backbone_w"].astype(jnp.bfloat16)
    feat = tiled_matmul(x, wb, relu=True, out_dtype=jnp.bfloat16)       # (B, feat_dim) bf16

    wf = params["img_fc_w"].astype(jnp.bfloat16)
    bf = params["img_fc_b"]
    M, K = feat.shape
    N = wf.shape[1]
    # Pad K to a tile multiple so the K block never becomes one huge VMEM block.
    tk, Kp = _tile_and_pad(K, 1024, 128)
    if Kp != K:
        feat = jnp.pad(feat, ((0, 0), (0, Kp - K)))
        wf = jnp.pad(wf, ((0, Kp - K), (0, 0)))
    # 128-row M tile so the parallel axis has >=2 blocks at realistic batch sizes
    # (keeps both v7x TensorCores busy); falls back to full M for tiny batches.
    tm = _tile(M, 128, 8)
    grid = (M // tm, Kp // tk)
    return pl.pallas_call(
        _fc_l2norm_kernel,
        out_shape=jax.ShapeDtypeStruct((M, N), jnp.float32),
        grid_spec=pltpu.PrefetchScalarGridSpec(
            num_scalar_prefetch=0, grid=grid,
            in_specs=[pl.BlockSpec((tm, tk), lambda i, k: (i, k)),
                      pl.BlockSpec((tk, N), lambda i, k: (k, 0)),
                      pl.BlockSpec((1, N), lambda i, k: (0, 0))],
            out_specs=pl.BlockSpec((tm, N), lambda i, k: (i, 0)),
            scratch_shapes=[pltpu.VMEM((tm, N), jnp.float32)]),
        compiler_params=pltpu.CompilerParams(
            dimension_semantics=("parallel", "arbitrary"),
            vmem_limit_bytes=_VMEM_LIMIT),
    )(feat, wf, bf)


# ----------------------------- Caption encoder (GRU) -----------------------------
def _gru_kernel(len_ref, gi_ref, h0_ref, whh_ref, bhh_ref, out_ref,
                h_st, o_st, *, tblk):
    t_blk = pl.program_id(1)
    H = h_st.shape[1]

    @pl.when(t_blk == 0)
    def _():
        h_st[...] = h0_ref[...]
        o_st[...] = jnp.zeros_like(o_st)

    lens = len_ref[...]                                     # (tb, 1) int32

    def step(t, carry):
        h, out = carry
        # gi = x_t @ W_ih + b_ih (hoisted, streamed in bf16), upcast for gate math.
        gi = gi_ref[t].astype(jnp.float32)                  # (tb, 3H)
        gh = jnp.dot(h.astype(jnp.bfloat16), whh_ref[...],
                     preferred_element_type=jnp.float32) + bhh_ref[...]
        r = jax.nn.sigmoid(gi[:, 0:H] + gh[:, 0:H])
        z = jax.nn.sigmoid(gi[:, H:2 * H] + gh[:, H:2 * H])
        n = jnp.tanh(gi[:, 2 * H:3 * H] + r * gh[:, 2 * H:3 * H])
        h_new = (1.0 - z) * n + z * h
        # Emulates pack/pad + torch.gather(cap_embs, 1, lengths - 1): capture the
        # hidden state of each sequence at its last valid timestep.
        t_global = t_blk * tblk + t
        is_last = (lens - 1) == t_global                    # (tb, 1) bool
        out = jnp.where(is_last, h_new, out)
        return h_new, out

    # h and the gathered output stay in vregs across the unrolled block; scratch
    # is only touched once per T-block (carry across grid steps).
    h, out = lax.fori_loop(0, tblk, step, (h_st[...], o_st[...]), unroll=True)
    h_st[...] = h
    o_st[...] = out

    @pl.when(t_blk == pl.num_programs(1) - 1)
    def _():
        out_ref[...] = out


def caption_encoder(caps, lengths, params, *, tblk=8):
    B, T = caps.shape
    H = params["h0"].shape[1]
    D = params["word_emb"].shape[1]
    threeH = 3 * H

    n_blk = -(-T // tblk)
    t_pad = n_blk * tblk
    if t_pad != T:
        # Pad the cheap int32 token ids (token 0) BEFORE embedding/projection:
        # padded steps evolve h but never match `lengths - 1`, so the gathered
        # output is unaffected — and no post-matmul HBM copy of gi is needed.
        caps = jnp.pad(caps, ((0, 0), (0, t_pad - T)))

    # Embedding lookup is glue (table gather); gather directly time-major so no
    # (B, T, D) -> (T, B, D) HBM transpose of the embedded tensor is needed.
    x_tm = jnp.take(params["word_emb"], caps.T, axis=0).astype(jnp.bfloat16)   # (Tpad, B, D)

    # Hoisted input projection: gi = x @ W_ih + b_ih for ALL timesteps as one
    # tiled MXU matmul (independent of h); emitted in bf16 to halve the HBM
    # stream that feeds the recurrence. The recurrence only does h @ W_hh.
    gi = tiled_matmul(x_tm.reshape(t_pad * B, D),
                      params["gru_w_ih_t"].astype(jnp.bfloat16),
                      bias=params["gru_b_ih"], out_dtype=jnp.bfloat16)
    gi = gi.reshape(t_pad, B, threeH)

    # Batch tiles form a leading "parallel" grid axis (splits the recurrence
    # across v7x's two TensorCores; neutral on single-TC v5e/v6e).
    tb = _tile(B, 128, 8)
    h0 = jnp.broadcast_to(params["h0"], (B, H)).astype(jnp.float32)
    len2d = lengths.reshape(B, 1).astype(jnp.int32)
    whh = params["gru_w_hh_t"].astype(jnp.bfloat16)
    bhh = params["gru_b_hh"]

    return pl.pallas_call(
        functools.partial(_gru_kernel, tblk=tblk),
        out_shape=jax.ShapeDtypeStruct((B, H), jnp.float32),
        grid_spec=pltpu.PrefetchScalarGridSpec(
            num_scalar_prefetch=0, grid=(B // tb, n_blk),
            in_specs=[pl.BlockSpec((tb, 1), lambda b, t: (b, 0)),
                      pl.BlockSpec((tblk, tb, threeH), lambda b, t: (t, b, 0)),
                      pl.BlockSpec((tb, H), lambda b, t: (b, 0)),
                      pl.BlockSpec((H, threeH), lambda b, t: (0, 0)),
                      pl.BlockSpec((1, threeH), lambda b, t: (0, 0))],
            out_specs=pl.BlockSpec((tb, H), lambda b, t: (b, 0)),
            scratch_shapes=[pltpu.VMEM((tb, H), jnp.float32),
                            pltpu.VMEM((tb, H), jnp.float32)]),
        compiler_params=pltpu.CompilerParams(
            dimension_semantics=("parallel", "arbitrary"),
            vmem_limit_bytes=_VMEM_LIMIT),
    )(len2d, gi, h0, whh, bhh)


# ----------------------------- Contrastive loss -----------------------------
def _contrastive_kernel(img_ref, capT_ref, out_ref, *, margin, mh):
    # scores[i, j] = <img_i, cap_j>; capT is pre-transposed in the wrapper so the
    # MXU sees an MN-form matmul (no in-kernel XLU transpose of cap_emb).
    scores = jnp.dot(img_ref[...], capT_ref[...], preferred_element_type=jnp.float32)
    B = scores.shape[0]
    row = lax.broadcasted_iota(jnp.int32, (B, B), 0)
    col = lax.broadcasted_iota(jnp.int32, (B, B), 1)
    eye = row == col
    # Both diagonals come from the SAME eye-masked scores (identical numerics,
    # no extra (B,E) operand needed); the reductions ride the XLU slot.
    diag = jnp.where(eye, scores, 0.0)
    d_row = jnp.sum(diag, axis=1, keepdims=True)            # (B, 1)
    d_col = jnp.sum(diag, axis=0, keepdims=True)            # (1, B)
    cost_capt = jnp.where(eye, 0.0, jnp.maximum(margin + scores - d_row, 0.0))
    cost_img = jnp.where(eye, 0.0, jnp.maximum(margin + scores - d_col, 0.0))
    if mh:
        total = jnp.sum(jnp.max(cost_capt, axis=1)) + jnp.sum(jnp.max(cost_img, axis=0))
    else:
        total = jnp.sum(cost_capt) + jnp.sum(cost_img)
    # TODO(synk): a (1,1) SMEM scalar output would avoid this lane-sparse VMEM
    # store; kept as a VMEM tile for lowering portability (negligible cost).
    out_ref[0, 0] = total


def contrastive_loss(img_emb, cap_emb, margin, mh):
    img_bf = img_emb.astype(jnp.bfloat16)
    capT_bf = jnp.transpose(cap_emb.astype(jnp.bfloat16))   # layout plumbing once in HBM
    vmem = pl.BlockSpec(memory_space=pltpu.MemorySpace.VMEM)
    out = pl.pallas_call(
        functools.partial(_contrastive_kernel, margin=float(margin), mh=mh),
        out_shape=jax.ShapeDtypeStruct((1, 1), jnp.float32),
        in_specs=[vmem, vmem],
        out_specs=vmem,
        compiler_params=pltpu.CompilerParams(vmem_limit_bytes=_VMEM_LIMIT),
    )(img_bf, capT_bf)
    return out[0, 0]


# ----------------------------- VSE forward -----------------------------
def vse_forward(params, imgs, caps, lengths, epoch, mode, *, sh_epochs, margin):
    img_emb = image_encoder(imgs, params)
    cap_emb = caption_encoder(caps, lengths, params)   # not l2-normalized, as in the reference
    if epoch <= sh_epochs:
        loss = contrastive_loss(img_emb, cap_emb, margin, mh=False)   # sum-of-hinges
    else:
        loss = contrastive_loss(img_emb, cap_emb, margin, mh=True)    # max-of-hinges
    if mode == "train":
        return loss
    return loss, img_emb, cap_emb


# ----------------------------- Parameter init -----------------------------
def init_params(key, *, C, Himg, Wimg, vocab, word_dim, emb_size, feat_dim):
    ks = jax.random.split(key, 7)
    in_dim = C * Himg * Wimg
    p = {}
    p["img_backbone_w"] = 0.02 * jax.random.normal(ks[0], (in_dim, feat_dim), jnp.float32)
    p["img_fc_w"] = 0.02 * jax.random.normal(ks[1], (feat_dim, emb_size), jnp.float32)
    p["img_fc_b"] = 0.02 * jax.random.normal(ks[2], (1, emb_size), jnp.float32)
    p["word_emb"] = 0.1 * jax.random.normal(ks[3], (vocab, word_dim), jnp.float32)
    # GRU weights stored pre-transposed: (in, 3H) / (H, 3H); gate order [r, z, n]
    p["gru_w_ih_t"] = 0.1 * jax.random.normal(ks[4], (word_dim, 3 * emb_size), jnp.float32)
    p["gru_w_hh_t"] = 0.1 * jax.random.normal(ks[5], (emb_size, 3 * emb_size), jnp.float32)
    p["gru_b_ih"] = jnp.zeros((1, 3 * emb_size), jnp.float32)
    p["gru_b_hh"] = jnp.zeros((1, 3 * emb_size), jnp.float32)
    p["h0"] = 0.1 * jax.random.normal(ks[6], (1, emb_size), jnp.float32)
    return p


if __name__ == "__main__":
    key = jax.random.PRNGKey(0)
    B, C, Hi, Wi = 4, 4, 16, 16         # images (NCHW)
    T, vocab = 8, 50                    # caption length / vocab size
    word_dim, emb_size, feat_dim = 32, 128, 256
    margin, sh_epochs = 0.2, 10

    kp, ki, kc = jax.random.split(key, 3)
    params = init_params(kp, C=C, Himg=Hi, Wimg=Wi, vocab=vocab,
                         word_dim=word_dim, emb_size=emb_size, feat_dim=feat_dim)
    imgs = jax.random.normal(ki, (B, C, Hi, Wi), jnp.float32)
    caps = jax.random.randint(kc, (B, T), 0, vocab, dtype=jnp.int32)
    lengths = jnp.array([8, 5, 7, 3], dtype=jnp.int32)

    # train mode, early epoch -> sum-of-hinges loss
    loss_sh = vse_forward(params, imgs, caps, lengths, epoch=1, mode="train",
                          sh_epochs=sh_epochs, margin=margin)
    # eval mode, late epoch -> max-of-hinges loss, also returns embeddings
    loss_mh, img_emb, cap_emb = vse_forward(params, imgs, caps, lengths, epoch=20,
                                            mode="eval", sh_epochs=sh_epochs,
                                            margin=margin)

    jax.block_until_ready((loss_sh, loss_mh, img_emb, cap_emb))
    assert img_emb.shape == (B, emb_size) and cap_emb.shape == (B, emb_size)
    assert bool(jnp.isfinite(loss_sh)) and bool(jnp.isfinite(loss_mh))
    print("KERNEL_OK")
</pallas_src>

<mosaic_0001>
module attributes {stable_mosaic.version = 11 : i64} {
  func.func @_mm_kernel(%arg0: i32, %arg1: i32, %arg2: i32, %arg3: memref<16x1024xbf16, #tpu.memory_space<vmem>>, %arg4: memref<1024x256xbf16, #tpu.memory_space<vmem>>, %arg5: memref<16x256xbf16, #tpu.memory_space<vmem>>, %arg6: memref<16x256xf32, #tpu.memory_space<vmem>>) attributes {dimension_semantics = [#tpu.dimension_semantics<parallel>, #tpu.dimension_semantics<parallel>, #tpu.dimension_semantics<arbitrary>], iteration_bounds = array<i64: 1, 1, 1>, scalar_prefetch = 0 : i64, scratch_operands = 1 : i64, tpu.core_type = #tpu.core_type<tc>, window_params = [{transform_indices = @transform_0, window_bounds = array<i64: 16, 1024>}, {transform_indices = @transform_1, window_bounds = array<i64: 1024, 256>}, {transform_indices = @transform_2, window_bounds = array<i64: 16, 256>}]} {
    %c0_i32 = arith.constant 0 : i32
    %0 = arith.cmpi eq, %arg2, %c0_i32 : i32
    %1 = arith.extui %0 : i1 to i32
    %c0_i32_0 = arith.constant 0 : i32
    %2 = arith.cmpi ne, %1, %c0_i32_0 : i32
    scf.if %2 {
      %cst_10 = arith.constant 0.000000e+00 : f32
      %12 = vector.broadcast %cst_10 : f32 to vector<16x256xf32>
      %c0_11 = arith.constant 0 : index
      %c0_12 = arith.constant 0 : index
      %13 = vector.load %arg6[%c0_11, %c0_12] : memref<16x256xf32, #tpu.memory_space<vmem>>, vector<16x256xf32>
      tpu.vector_store %arg6[%c0_11, %c0_12], %12 {strides = array<i32>} : memref<16x256xf32, #tpu.memory_space<vmem>>, vector<16x256xf32>,
    } else {
    }
    %c0 = arith.constant 0 : index
    %c0_1 = arith.constant 0 : index
    %3 = vector.load %arg6[%c0, %c0_1] : memref<16x256xf32, #tpu.memory_space<vmem>>, vector<16x256xf32>
    %c0_2 = arith.constant 0 : index
    %c0_3 = arith.constant 0 : index
    %4 = vector.load %arg3[%c0_2, %c0_3] : memref<16x1024xbf16, #tpu.memory_space<vmem>>, vector<16x1024xbf16>
    %c0_4 = arith.constant 0 : index
    %c0_5 = arith.constant 0 : index
    %5 = vector.load %arg4[%c0_4, %c0_5] : memref<1024x256xbf16, #tpu.memory_space<vmem>>, vector<1024x256xbf16>
    %cst = arith.constant dense<0.000000e+00> : vector<16x256xf32>
    %6 = tpu.matmul %4, %5, %cst {dimension_numbers = #tpu.dot_dimension_numbers<[1], [0], [0], [1], [0, 0, 1, 1], [], []>} : vector<16x1024xbf16>, vector<1024x256xbf16>, vector<16x256xf32> -> vector<16x256xf32>
    %7 = arith.addf %3, %6 : vector<16x256xf32>
    %c0_6 = arith.constant 0 : index
    %c0_7 = arith.constant 0 : index
    %8 = vector.load %arg6[%c0_6, %c0_7] : memref<16x256xf32, #tpu.memory_space<vmem>>, vector<16x256xf32>
    tpu.vector_store %arg6[%c0_6, %c0_7], %7 {strides = array<i32>} : memref<16x256xf32, #tpu.memory_space<vmem>>, vector<16x256xf32>,
    %c0_i32_8 = arith.constant 0 : i32
    %9 = arith.cmpi eq, %arg2, %c0_i32_8 : i32
    %10 = arith.extui %9 : i1 to i32
    %c0_i32_9 = arith.constant 0 : i32
    %11 = arith.cmpi ne, %10, %c0_i32_9 : i32
    scf.if %11 {
      %c0_10 = arith.constant 0 : index
      %c0_11 = arith.constant 0 : index
      %12 = vector.load %arg6[%c0_10, %c0_11] : memref<16x256xf32, #tpu.memory_space<vmem>>, vector<16x256xf32>
      %cst_12 = arith.constant 0.000000e+00 : f32
      %13 = vector.broadcast %cst_12 : f32 to vector<16x256xf32>
      %14 = arith.maximumf %12, %13 : vector<16x256xf32>
      %15 = arith.truncf %14 : vector<16x256xf32> to vector<16x256xbf16>
      %c0_13 = arith.constant 0 : index
      %c0_14 = arith.constant 0 : index
      %16 = vector.load %arg5[%c0_13, %c0_14] : memref<16x256xbf16, #tpu.memory_space<vmem>>, vector<16x256xbf16>
      tpu.vector_store %arg5[%c0_13, %c0_14], %15 {strides = array<i32>} : memref<16x256xbf16, #tpu.memory_space<vmem>>, vector<16x256xbf16>,
    } else {
    }
    return
  }
  func.func @transform_0(%arg0: i32, %arg1: i32, %arg2: i32) -> (i32, i32) {
    %c0_i32 = arith.constant 0 : i32
    return %arg0, %arg2 : i32, i32
  }
  func.func @transform_1(%arg0: i32, %arg1: i32, %arg2: i32) -> (i32, i32) {
    %c0_i32 = arith.constant 0 : i32
    return %arg2, %arg1 : i32, i32
  }
  func.func @transform_2(%arg0: i32, %arg1: i32, %arg2: i32) -> (i32, i32) {
    %c0_i32 = arith.constant 0 : i32
    return %arg0, %arg1 : i32, i32
  }
}

</mosaic_0001>

<llo_original>
// kernel: tpu_custom_call.1
$region0: #{tpu_custom_call.1}
  #allocation0 [shape = 'u32[]', space=smem, size = 0x4, offset = 0x4, fixed_abs, tag = 'smem constant byte address 0x4 - core index']
  #allocation1 [shape = 'u32[144,128]{1,0:T(1,128)}', space=vmem, size = 0x12000, scoped, tag = 'internal scratch']
  #allocation2 [shape = 'f32[16,256]{1,0:T(8,128)}', space=vmem, size = 0x4000, scoped, tag = 'scratch operand']
  %s0 = inlined_call_operand.hbm [shape: bf16[16,1024], index: 0, kind: input, shape index: {}]
  %s1 = inlined_call_operand.hbm [shape: bf16[1024,256], index: 1, kind: input, shape index: {}]
  %s2 = inlined_call_operand.hbm [shape: bf16[16,256], index: 2, kind: output, shape index: {}]
  %s3 = sld [smem:[#allocation0]]
  $region34: #{tpu_custom_call.1} parent=0
    _
  %s5 = ssub.s32 1, %s3
  %s6 = scalar_select 0, %s5, %s3
  $region1: #{tpu_custom_call.1} parent=0
    #allocation3 [shape = 'u8[32768]{0}', space=vmem, size = 0x8000, scoped, tag = 'input window, operand 0, single buffered']
    #allocation4 [shape = 's32[1]{0}', space=sflag, size = 0x4, scoped, tag = 'scoped memory for tpu_custom_call.1']
    #allocation5 [shape = 's32[1]{0}', space=sflag, size = 0x4, scoped, tag = 'scoped memory for tpu_custom_call.1']
    #allocation6 [shape = 'u8[524288]{0}', space=vmem, size = 0x80000, scoped, tag = 'input window, operand 1, single buffered']
    #allocation7 [shape = 's32[1]{0}', space=sflag, size = 0x4, scoped, tag = 'scoped memory for tpu_custom_call.1']
    #allocation8 [shape = 'u8[8192]{0}', space=vmem, size = 0x2000, scoped, tag = 'output window, operand 0, single buffered']
    %7 = vsyncpa [#allocation4], 0
    %8 = vsyncpa [#allocation7], 0
    %9 = vsyncpa [#allocation5], 0
    // Predicated region
    $region2: #{tpu_custom_call.1} parent=1 // pred_check
      _
    $region3: #{tpu_custom_call.1} parent=1 // pred_check_branch
      %11 = sbr.rel (0) target = $region5
    $region4: #{tpu_custom_call.1} parent=1 // pred_region
      %s13 = ssub.s32 1024, 1024
      %14 = vsyncadd [#allocation4], %s13
      %s15 = sshll.u32 [#allocation3], 4
      %s16 = int_to_ptr.vmem [resolvable:$true] %s15
      %21 = dma.hbm_to_vmem [thread:$0]  %s0, 1024, %s16, [#allocation4], 512, 512, 32
    $region5: #{tpu_custom_call.1} parent=1 // pred_fallthru
      _
    // Predicated region
    $region6: #{tpu_custom_call.1} parent=1 // pred_check
      _
    $region7: #{tpu_custom_call.1} parent=1 // pred_check_branch
      %23 = sbr.rel (0) target = $region9
    $region8: #{tpu_custom_call.1} parent=1 // pred_region
      %s25 = ssub.s32 16384, 16384
      %26 = vsyncadd [#allocation7], %s25
      %s27 = sshll.u32 [#allocation6], 4
      %s28 = int_to_ptr.vmem [resolvable:$true] %s27
      %33 = dma.hbm_to_vmem [thread:$0]  %s1, 16384, %s28, [#allocation7], 128, 128, 8
    $region9: #{tpu_custom_call.1} parent=1 // pred_fallthru
      _
    // Predicated region
    $region10: #{tpu_custom_call.1} parent=1 // pred_check
      _
    $region11: #{tpu_custom_call.1} parent=1 // pred_check_branch
      %35 = sbr.rel (0) target = $region13
    $region12: #{tpu_custom_call.1} parent=1 // pred_region
      %36 = dma.done [#allocation4], 1024
    $region13: #{tpu_custom_call.1} parent=1 // pred_fallthru
      _
    // Predicated region
    $region14: #{tpu_custom_call.1} parent=1 // pred_check
      _
    $region15: #{tpu_custom_call.1} parent=1 // pred_check_branch
      %38 = sbr.rel (0) target = $region17
    $region16: #{tpu_custom_call.1} parent=1 // pred_region
      %39 = dma.done [#allocation7], 16384
    $region17: #{tpu_custom_call.1} parent=1 // pred_fallthru
      _
    %p40 = scmp.eq.s32.totalorder 0, 0
    // Predicated region
    $region18: #{tpu_custom_call.1} parent=1 // pred_check
      %p41 = pneg %p40
    $region19: #{tpu_custom_call.1} parent=1 // pred_check_branch
      %43 = sbr.rel (%p41) target = $region21
    $region20: #{tpu_custom_call.1} parent=1 // pred_region
      %44 = vst [vmem:[#allocation2] sm:$0xff] 0.0
      %45 = vst [vmem:[#allocation2 + $0x8] sm:$0xff] 0.0
      %46 = vst [vmem:[#allocation2 + $0x10] sm:$0xff] 0.0
      %47 = vst [vmem:[#allocation2 + $0x18] sm:$0xff] 0.0
    $region21: #{tpu_custom_call.1} parent=1 // pred_fallthru
      _
    %v48 = vld [vmem:[#allocation2] sm:$0xff]
    %v49 = vld [vmem:[#allocation2 + $0x8] sm:$0xff]
    %v50 = vld [vmem:[#allocation2 + $0x10] sm:$0xff]
    %v51 = vld [vmem:[#allocation2 + $0x18] sm:$0xff]
    %v52 = vld [vmem:[#allocation3] sm:$0xff]
    %v53 = vld [vmem:[#allocation3 + $0x8] sm:$0xff]
    %v54 = vld [vmem:[#allocation3 + $0x10] sm:$0xff]
    %v55 = vld [vmem:[#allocation3 + $0x18] sm:$0xff]
    %v56 = vld [vmem:[#allocation3 + $0x20] sm:$0xff]
    %v57 = vld [vmem:[#allocation3 + $0x28] sm:$0xff]
    %v58 = vld [vmem:[#allocation3 + $0x30] sm:$0xff]
    %v59 = vld [vmem:[#allocation3 + $0x38] sm:$0xff]
    %v60 = vld [vmem:[#allocation6] sm:$0xff]
    %v61 = vld [vmem:[#allocation6 + $0x8] sm:$0xff]
    %v62 = vld [vmem:[#allocation6 + $0x10] sm:$0xff]
    %v63 = vld [vmem:[#allocation6 + $0x18] sm:$0xff]
    %v64 = vld [vmem:[#allocation6 + $0x20] sm:$0xff]
    %v65 = vld [vmem:[#allocation6 + $0x28] sm:$0xff]
    %v66 = vld [vmem:[#allocation6 + $0x30] sm:$0xff]
    %v67 = vld [vmem:[#allocation6 + $0x38] sm:$0xff]
    %v68 = vld [vmem:[#allocation6 + $0x40] sm:$0xff]
    %v69 = vld [vmem:[#allocation6 + $0x48] sm:$0xff]
    %v70 = vld [vmem:[#allocation6 + $0x50] sm:$0xff]
    %v71 = vld [vmem:[#allocation6 + $0x58] sm:$0xff]
    %v72 = vld [vmem:[#allocation6 + $0x60] sm:$0xff]
    %v73 = vld [vmem:[#allocation6 + $0x68] sm:$0xff]
    %v74 = vld [vmem:[#allocation6 + $0x70] sm:$0xff]
    %v75 = vld [vmem:[#allocation6 + $0x78] sm:$0xff]
    %v76 = vld [vmem:[#allocation6 + $0x80] sm:$0xff]
    %v77 = vld [vmem:[#allocation6 + $0x88] sm:$0xff]
    %v78 = vld [vmem:[#allocation6 + $0x90] sm:$0xff]
    %v79 = vld [vmem:[#allocation6 + $0x98] sm:$0xff]
    %v80 = vld [vmem:[#allocation6 + $0xa0] sm:$0xff]
    %v81 = vld [vmem:[#allocation6 + $0xa8] sm:$0xff]
    %v82 = vld [vmem:[#allocation6 + $0xb0] sm:$0xff]
    %v83 = vld [vmem:[#allocation6 + $0xb8] sm:$0xff]
    %v84 = vld [vmem:[#allocation6 + $0xc0] sm:$0xff]
    %v85 = vld [vmem:[#allocation6 + $0xc8] sm:$0xff]
    %v86 = vld [vmem:[#allocation6 + $0xd0] sm:$0xff]
    %v87 = vld [vmem:[#allocation6 + $0xd8] sm:$0xff]
    %v88 = vld [vmem:[#allocation6 + $0xe0] sm:$0xff]
    %v89 = vld [vmem:[#allocation6 + $0xe8] sm:$0xff]
    %v90 = vld [vmem:[#allocation6 + $0xf0] sm:$0xff]
    %v91 = vld [vmem:[#allocation6 + $0xf8] sm:$0xff]
    %v92 = vld [vmem:[#allocation6 + $0x100] sm:$0xff]
    %v93 = vld [vmem:[#allocation6 + $0x108] sm:$0xff]
    %v94 = vld [vmem:[#allocation6 + $0x110] sm:$0xff]
    %v95 = vld [vmem:[#allocation6 + $0x118] sm:$0xff]
    %v96 = vld [vmem:[#allocation6 + $0x120] sm:$0xff]
    %v97 = vld [vmem:[#allocation6 + $0x128] sm:$0xff]
    %v98 = vld [vmem:[#allocation6 + $0x130] sm:$0xff]
    %v99 = vld [vmem:[#allocation6 + $0x138] sm:$0xff]
    %v100 = vld [vmem:[#allocation6 + $0x140] sm:$0xff]
    %v101 = vld [vmem:[#allocation6 + $0x148] sm:$0xff]
    %v102 = vld [vmem:[#allocation6 + $0x150] sm:$0xff]
    %v103 = vld [vmem:[#allocation6 + $0x158] sm:$0xff]
    %v104 = vld [vmem:[#allocation6 + $0x160] sm:$0xff]
    %v105 = vld [vmem:[#allocation6 + $0x168] sm:$0xff]
    %v106 = vld [vmem:[#allocation6 + $0x170] sm:$0xff]
    %v107 = vld [vmem:[#allocation6 + $0x178] sm:$0xff]
    %v108 = vld [vmem:[#allocation6 + $0x180] sm:$0xff]
    %v109 = vld [vmem:[#allocation6 + $0x188] sm:$0xff]
    %v110 = vld [vmem:[#allocation6 + $0x190] sm:$0xff]
    %v111 = vld [vmem:[#allocation6 + $0x198] sm:$0xff]
    %v112 = vld [vmem:[#allocation6 + $0x1a0] sm:$0xff]
    %v113 = vld [vmem:[#allocation6 + $0x1a8] sm:$0xff]
    %v114 = vld [vmem:[#allocation6 + $0x1b0] sm:$0xff]
    %v115 = vld [vmem:[#allocation6 + $0x1b8] sm:$0xff]
    %v116 = vld [vmem:[#allocation6 + $0x1c0] sm:$0xff]
    %v117 = vld [vmem:[#allocation6 + $0x1c8] sm:$0xff]
    %v118 = vld [vmem:[#allocation6 + $0x1d0] sm:$0xff]
    %v119 = vld [vmem:[#allocation6 + $0x1d8] sm:$0xff]
    %v120 = vld [vmem:[#allocation6 + $0x1e0] sm:$0xff]
    %v121 = vld [vmem:[#allocation6 + $0x1e8] sm:$0xff]
    %v122 = vld [vmem:[#allocation6 + $0x1f0] sm:$0xff]
    %v123 = vld [vmem:[#allocation6 + $0x1f8] sm:$0xff]
    %v124 = vld [vmem:[#allocation6 + $0x200] sm:$0xff]
    %v125 = vld [vmem:[#allocation6 + $0x208] sm:$0xff]
    %v126 = vld [vmem:[#allocation6 + $0x210] sm:$0xff]
    %v127 = vld [vmem:[#allocation6 + $0x218] sm:$0xff]
    %v128 = vld [vmem:[#allocation6 + $0x220] sm:$0xff]
    %v129 = vld [vmem:[#allocation6 + $0x228] sm:$0xff]
    %v130 = vld [vmem:[#allocation6 + $0x230] sm:$0xff]
    %v131 = vld [vmem:[#allocation6 + $0x238] sm:$0xff]
    %v132 = vld [vmem:[#allocation6 + $0x240] sm:$0xff]
    %v133 = vld [vmem:[#allocation6 + $0x248] sm:$0xff]
    %v134 = vld [vmem:[#allocation6 + $0x250] sm:$0xff]
    %v135 = vld [vmem:[#allocation6 + $0x258] sm:$0xff]
    %v136 = vld [vmem:[#allocation6 + $0x260] sm:$0xff]
    %v137 = vld [vmem:[#allocation6 + $0x268] sm:$0xff]
    %v138 = vld [vmem:[#allocation6 + $0x270] sm:$0xff]
    %v139 = vld [vmem:[#allocation6 + $0x278] sm:$0xff]
    %v140 = vld [vmem:[#allocation6 + $0x280] sm:$0xff]
    %v141 = vld [vmem:[#allocation6 + $0x288] sm:$0xff]
    %v142 = vld [vmem:[#allocation6 + $0x290] sm:$0xff]
    %v143 = vld [vmem:[#allocation6 + $0x298] sm:$0xff]
    %v144 = vld [vmem:[#allocation6 + $0x2a0] sm:$0xff]
    %v145 = vld [vmem:[#allocation6 + $0x2a8] sm:$0xff]
    %v146 = vld [vmem:[#allocation6 + $0x2b0] sm:$0xff]
    %v147 = vld [vmem:[#allocation6 + $0x2b8] sm:$0xff]
    %v148 = vld [vmem:[#allocation6 + $0x2c0] sm:$0xff]
    %v149 = vld [vmem:[#allocation6 + $0x2c8] sm:$0xff]
    %v150 = vld [vmem:[#allocation6 + $0x2d0] sm:$0xff]
    %v151 = vld [vmem:[#allocation6 + $0x2d8] sm:$0xff]
    %v152 = vld [vmem:[#allocation6 + $0x2e0] sm:$0xff]
    %v153 = vld [vmem:[#allocation6 + $0x2e8] sm:$0xff]
    %v154 = vld [vmem:[#allocation6 + $0x2f0] sm:$0xff]
    %v155 = vld [vmem:[#allocation6 + $0x2f8] sm:$0xff]
    %v156 = vld [vmem:[#allocation6 + $0x300] sm:$0xff]
    %v157 = vld [vmem:[#allocation6 + $0x308] sm:$0xff]
    %v158 = vld [vmem:[#allocation6 + $0x310] sm:$0xff]
    %v159 = vld [vmem:[#allocation6 + $0x318] sm:$0xff]
    %v160 = vld [vmem:[#allocation6 + $0x320] sm:$0xff]
    %v161 = vld [vmem:[#allocation6 + $0x328] sm:$0xff]
    %v162 = vld [vmem:[#allocation6 + $0x330] sm:$0xff]
    %v163 = vld [vmem:[#allocation6 + $0x338] sm:$0xff]
    %v164 = vld [vmem:[#allocation6 + $0x340] sm:$0xff]
    %v165 = vld [vmem:[#allocation6 + $0x348] sm:$0xff]
    %v166 = vld [vmem:[#allocation6 + $0x350] sm:$0xff]
    %v167 = vld [vmem:[#allocation6 + $0x358] sm:$0xff]
    %v168 = vld [vmem:[#allocation6 + $0x360] sm:$0xff]
    %v169 = vld [vmem:[#allocation6 + $0x368] sm:$0xff]
    %v170 = vld [vmem:[#allocation6 + $0x370] sm:$0xff]
    %v171 = vld [vmem:[#allocation6 + $0x378] sm:$0xff]
    %v172 = vld [vmem:[#allocation6 + $0x380] sm:$0xff]
    %v173 = vld [vmem:[#allocation6 + $0x388] sm:$0xff]
    %v174 = vld [vmem:[#allocation6 + $0x390] sm:$0xff]
    %v175 = vld [vmem:[#allocation6 + $0x398] sm:$0xff]
    %v176 = vld [vmem:[#allocation6 + $0x3a0] sm:$0xff]
    %v177 = vld [vmem:[#allocation6 + $0x3a8] sm:$0xff]
    %v178 = vld [vmem:[#allocation6 + $0x3b0] sm:$0xff]
    %v179 = vld [vmem:[#allocation6 + $0x3b8] sm:$0xff]
    %v180 = vld [vmem:[#allocation6 + $0x3c0] sm:$0xff]
    %v181 = vld [vmem:[#allocation6 + $0x3c8] sm:$0xff]
    %v182 = vld [vmem:[#allocation6 + $0x3d0] sm:$0xff]
    %v183 = vld [vmem:[#allocation6 + $0x3d8] sm:$0xff]
    %v184 = vld [vmem:[#allocation6 + $0x3e0] sm:$0xff]
    %v185 = vld [vmem:[#allocation6 + $0x3e8] sm:$0xff]
    %v186 = vld [vmem:[#allocation6 + $0x3f0] sm:$0xff]
    %v187 = vld [vmem:[#allocation6 + $0x3f8] sm:$0xff]
    %v196 = vunpack.c.l.b16 %v52
    %v197 = vunpack.c.h.b16 %v52
    %v198 = vunpack.c.l.b16 %v53
    %v199 = vunpack.c.h.b16 %v53
    %v200 = vunpack.c.l.b16 %v54
    %v201 = vunpack.c.h.b16 %v54
    %v202 = vunpack.c.l.b16 %v55
    %v203 = vunpack.c.h.b16 %v55
    %v204 = vunpack.c.l.b16 %v56
    %v205 = vunpack.c.h.b16 %v56
    %v206 = vunpack.c.l.b16 %v57
    %v207 = vunpack.c.h.b16 %v57
    %v208 = vunpack.c.l.b16 %v58
    %v209 = vunpack.c.h.b16 %v58
    %v210 = vunpack.c.l.b16 %v59
    %v211 = vunpack.c.h.b16 %v59
    %v212 = vpack.c.b16 %v204, %v196
    %v213 = vpack.c.b16 %v205, %v197
    %v214 = vpack.c.b16 %v206, %v198
    %v215 = vpack.c.b16 %v207, %v199
    %v216 = vpack.c.b16 %v208, %v200
    %v217 = vpack.c.b16 %v209, %v201
    %v218 = vpack.c.b16 %v210, %v202
    %v219 = vpack.c.b16 %v211, %v203
    %v356 = vunpack.c.l.b16 %v60
    %v357 = vunpack.c.h.b16 %v60
    %v358 = vunpack.c.l.b16 %v61
    %v359 = vunpack.c.h.b16 %v61
    %v360 = vunpack.c.l.b16 %v62
    %v361 = vunpack.c.h.b16 %v62
    %v362 = vunpack.c.l.b16 %v63
    %v363 = vunpack.c.h.b16 %v63
    %v364 = vunpack.c.l.b16 %v64
    %v365 = vunpack.c.h.b16 %v64
    %v366 = vunpack.c.l.b16 %v65
    %v367 = vunpack.c.h.b16 %v65
    %v368 = vunpack.c.l.b16 %v66
    %v369 = vunpack.c.h.b16 %v66
    %v370 = vunpack.c.l.b16 %v67
    %v371 = vunpack.c.h.b16 %v67
    %v372 = vunpack.c.l.b16 %v68
    %v373 = vunpack.c.h.b16 %v68
    %v374 = vunpack.c.l.b16 %v69
    %v375 = vunpack.c.h.b16 %v69
    %v376 = vunpack.c.l.b16 %v70
    %v377 = vunpack.c.h.b16 %v70
    %v378 = vunpack.c.l.b16 %v71
    %v379 = vunpack.c.h.b16 %v71
    %v380 = vunpack.c.l.b16 %v72
    %v381 = vunpack.c.h.b16 %v72
    %v382 = vunpack.c.l.b16 %v73
    %v383 = vunpack.c.h.b16 %v73
    %v384 = vunpack.c.l.b16 %v74
    %v385 = vunpack.c.h.b16 %v74
    %v386 = vunpack.c.l.b16 %v75
    %v387 = vunpack.c.h.b16 %v75
    %v388 = vunpack.c.l.b16 %v76
    %v389 = vunpack.c.h.b16 %v76
    %v390 = vunpack.c.l.b16 %v77
    %v391 = vunpack.c.h.b16 %v77
    %v392 = vunpack.c.l.b16 %v78
    %v393 = vunpack.c.h.b16 %v78
    %v394 = vunpack.c.l.b16 %v79
    %v395 = vunpack.c.h.b16 %v79
    %v396 = vunpack.c.l.b16 %v80
    %v397 = vunpack.c.h.b16 %v80
    %v398 = vunpack.c.l.b16 %v81
    %v399 = vunpack.c.h.b16 %v81
    %v400 = vunpack.c.l.b16 %v82
    %v401 = vunpack.c.h.b16 %v82
    %v402 = vunpack.c.l.b16 %v83
    %v403 = vunpack.c.h.b16 %v83
    %v404 = vunpack.c.l.b16 %v84
    %v405 = vunpack.c.h.b16 %v84
    %v406 = vunpack.c.l.b16 %v85
    %v407 = vunpack.c.h.b16 %v85
    %v408 = vunpack.c.l.b16 %v86
    %v409 = vunpack.c.h.b16 %v86
    %v410 = vunpack.c.l.b16 %v87
    %v411 = vunpack.c.h.b16 %v87
    %v412 = vunpack.c.l.b16 %v88
    %v413 = vunpack.c.h.b16 %v88
    %v414 = vunpack.c.l.b16 %v89
    %v415 = vunpack.c.h.b16 %v89
    %v416 = vunpack.c.l.b16 %v90
    %v417 = vunpack.c.h.b16 %v90
    %v418 = vunpack.c.l.b16 %v91
    %v419 = vunpack.c.h.b16 %v91
    %v420 = vunpack.c.l.b16 %v92
    %v421 = vunpack.c.h.b16 %v92
    %v422 = vunpack.c.l.b16 %v93
    %v423 = vunpack.c.h.b16 %v93
    %v424 = vunpack.c.l.b16 %v94
    %v425 = vunpack.c.h.b16 %v94
    %v426 = vunpack.c.l.b16 %v95
    %v427 = vunpack.c.h.b16 %v95
    %v428 = vunpack.c.l.b16 %v96
    %v429 = vunpack.c.h.b16 %v96
    %v430 = vunpack.c.l.b16 %v97
    %v431 = vunpack.c.h.b16 %v97
    %v432 = vunpack.c.l.b16 %v98
    %v433 = vunpack.c.h.b16 %v98
    %v434 = vunpack.c.l.b16 %v99
    %v435 = vunpack.c.h.b16 %v99
    %v436 = vunpack.c.l.b16 %v100
    %v437 = vunpack.c.h.b16 %v100
    %v438 = vunpack.c.l.b16 %v101
    %v439 = vunpack.c.h.b16 %v101
    %v440 = vunpack.c.l.b16 %v102
    %v441 = vunpack.c.h.b16 %v102
    %v442 = vunpack.c.l.b16 %v103
    %v443 = vunpack.c.h.b16 %v103
    %v444 = vunpack.c.l.b16 %v104
    %v445 = vunpack.c.h.b16 %v104
    %v446 = vunpack.c.l.b16 %v105
    %v447 = vunpack.c.h.b16 %v105
    %v448 = vunpack.c.l.b16 %v106
    %v449 = vunpack.c.h.b16 %v106
    %v450 = vunpack.c.l.b16 %v107
    %v451 = vunpack.c.h.b16 %v107
    %v452 = vunpack.c.l.b16 %v108
    %v453 = vunpack.c.h.b16 %v108
    %v454 = vunpack.c.l.b16 %v109
    %v455 = vunpack.c.h.b16 %v109
    %v456 = vunpack.c.l.b16 %v110
    %v457 = vunpack.c.h.b16 %v110
    %v458 = vunpack.c.l.b16 %v111
    %v459 = vunpack.c.h.b16 %v111
    %v460 = vunpack.c.l.b16 %v112
    %v461 = vunpack.c.h.b16 %v112
    %v462 = vunpack.c.l.b16 %v113
    %v463 = vunpack.c.h.b16 %v113
    %v464 = vunpack.c.l.b16 %v114
    %v465 = vunpack.c.h.b16 %v114
    %v466 = vunpack.c.l.b16 %v115
    %v467 = vunpack.c.h.b16 %v115
    %v468 = vunpack.c.l.b16 %v116
    %v469 = vunpack.c.h.b16 %v116
    %v470 = vunpack.c.l.b16 %v117
    %v471 = vunpack.c.h.b16 %v117
    %v472 = vunpack.c.l.b16 %v118
    %v473 = vunpack.c.h.b16 %v118
    %v474 = vunpack.c.l.b16 %v119
    %v475 = vunpack.c.h.b16 %v119
    %v476 = vunpack.c.l.b16 %v120
    %v477 = vunpack.c.h.b16 %v120
    %v478 = vunpack.c.l.b16 %v121
    %v479 = vunpack.c.h.b16 %v121
    %v480 = vunpack.c.l.b16 %v122
    %v481 = vunpack.c.h.b16 %v122
    %v482 = vunpack.c.l.b16 %v123
    %v483 = vunpack.c.h.b16 %v123
    %v484 = vunpack.c.l.b16 %v124
    %v485 = vunpack.c.h.b16 %v124
    %v486 = vunpack.c.l.b16 %v125
    %v487 = vunpack.c.h.b16 %v125
    %v488 = vunpack.c.l.b16 %v126
    %v489 = vunpack.c.h.b16 %v126
    %v490 = vunpack.c.l.b16 %v127
    %v491 = vunpack.c.h.b16 %v127
    %v492 = vunpack.c.l.b16 %v128
    %v493 = vunpack.c.h.b16 %v128
    %v494 = vunpack.c.l.b16 %v129
    %v495 = vunpack.c.h.b16 %v129
    %v496 = vunpack.c.l.b16 %v130
    %v497 = vunpack.c.h.b16 %v130
    %v498 = vunpack.c.l.b16 %v131
    %v499 = vunpack.c.h.b16 %v131
    %v500 = vunpack.c.l.b16 %v132
    %v501 = vunpack.c.h.b16 %v132
    %v502 = vunpack.c.l.b16 %v133
    %v503 = vunpack.c.h.b16 %v133
    %v504 = vunpack.c.l.b16 %v134
    %v505 = vunpack.c.h.b16 %v134
    %v506 = vunpack.c.l.b16 %v135
    %v507 = vunpack.c.h.b16 %v135
    %v508 = vunpack.c.l.b16 %v136
    %v509 = vunpack.c.h.b16 %v136
    %v510 = vunpack.c.l.b16 %v137
    %v511 = vunpack.c.h.b16 %v137
    %v512 = vunpack.c.l.b16 %v138
    %v513 = vunpack.c.h.b16 %v138
    %v514 = vunpack.c.l.b16 %v139
    %v515 = vunpack.c.h.b16 %v139
    %v516 = vunpack.c.l.b16 %v140
    %v517 = vunpack.c.h.b16 %v140
    %v518 = vunpack.c.l.b16 %v141
    %v519 = vunpack.c.h.b16 %v141
    %v520 = vunpack.c.l.b16 %v142
    %v521 = vunpack.c.h.b16 %v142
    %v522 = vunpack.c.l.b16 %v143
    %v523 = vunpack.c.h.b16 %v143
    %v524 = vunpack.c.l.b16 %v144
    %v525 = vunpack.c.h.b16 %v144
    %v526 = vunpack.c.l.b16 %v145
    %v527 = vunpack.c.h.b16 %v145
    %v528 = vunpack.c.l.b16 %v146
    %v529 = vunpack.c.h.b16 %v146
    %v530 = vunpack.c.l.b16 %v147
    %v531 = vunpack.c.h.b16 %v147
    %v532 = vunpack.c.l.b16 %v148
    %v533 = vunpack.c.h.b16 %v148
    %v534 = vunpack.c.l.b16 %v149
    %v535 = vunpack.c.h.b16 %v149
    %v536 = vunpack.c.l.b16 %v150
    %v537 = vunpack.c.h.b16 %v150
    %v538 = vunpack.c.l.b16 %v151
    %v539 = vunpack.c.h.b16 %v151
    %v540 = vunpack.c.l.b16 %v152
    %v541 = vunpack.c.h.b16 %v152
    %v542 = vunpack.c.l.b16 %v153
    %v543 = vunpack.c.h.b16 %v153
    %v544 = vunpack.c.l.b16 %v154
    %v545 = vunpack.c.h.b16 %v154
    %v546 = vunpack.c.l.b16 %v155
    %v547 = vunpack.c.h.b16 %v155
    %v548 = vunpack.c.l.b16 %v156
    %v549 = vunpack.c.h.b16 %v156
    %v550 = vunpack.c.l.b16 %v157
    %v551 = vunpack.c.h.b16 %v157
    %v552 = vunpack.c.l.b16 %v158
    %v553 = vunpack.c.h.b16 %v158
    %v554 = vunpack.c.l.b16 %v159
    %v555 = vunpack.c.h.b16 %v159
    %v556 = vunpack.c.l.b16 %v160
    %v557 = vunpack.c.h.b16 %v160
    %v558 = vunpack.c.l.b16 %v161
    %v559 = vunpack.c.h.b16 %v161
    %v560 = vunpack.c.l.b16 %v162
    %v561 = vunpack.c.h.b16 %v162
    %v562 = vunpack.c.l.b16 %v163
    %v563 = vunpack.c.h.b16 %v163
    %v564 = vunpack.c.l.b16 %v164
    %v565 = vunpack.c.h.b16 %v164
    %v566 = vunpack.c.l.b16 %v165
    %v567 = vunpack.c.h.b16 %v165
    %v568 = vunpack.c.l.b16 %v166
    %v569 = vunpack.c.h.b16 %v166
    %v570 = vunpack.c.l.b16 %v167
    %v571 = vunpack.c.h.b16 %v167
    %v572 = vunpack.c.l.b16 %v168
    %v573 = vunpack.c.h.b16 %v168
    %v574 = vunpack.c.l.b16 %v169
    %v575 = vunpack.c.h.b16 %v169
    %v576 = vunpack.c.l.b16 %v170
    %v577 = vunpack.c.h.b16 %v170
    %v578 = vunpack.c.l.b16 %v171
    %v579 = vunpack.c.h.b16 %v171
    %v580 = vunpack.c.l.b16 %v172
    %v581 = vunpack.c.h.b16 %v172
    %v582 = vunpack.c.l.b16 %v173
    %v583 = vunpack.c.h.b16 %v173
    %v584 = vunpack.c.l.b16 %v174
    %v585 = vunpack.c.h.b16 %v174
    %v586 = vunpack.c.l.b16 %v175
    %v587 = vunpack.c.h.b16 %v175
    %v588 = vunpack.c.l.b16 %v176
    %v589 = vunpack.c.h.b16 %v176
    %v590 = vunpack.c.l.b16 %v177
    %v591 = vunpack.c.h.b16 %v177
    %v592 = vunpack.c.l.b16 %v178
    %v593 = vunpack.c.h.b16 %v178
    %v594 = vunpack.c.l.b16 %v179
    %v595 = vunpack.c.h.b16 %v179
    %v596 = vunpack.c.l.b16 %v180
    %v597 = vunpack.c.h.b16 %v180
    %v598 = vunpack.c.l.b16 %v181
    %v599 = vunpack.c.h.b16 %v181
    %v600 = vunpack.c.l.b16 %v182
    %v601 = vunpack.c.h.b16 %v182
    %v602 = vunpack.c.l.b16 %v183
    %v603 = vunpack.c.h.b16 %v183
    %v604 = vunpack.c.l.b16 %v184
    %v605 = vunpack.c.h.b16 %v184
    %v606 = vunpack.c.l.b16 %v185
    %v607 = vunpack.c.h.b16 %v185
    %v608 = vunpack.c.l.b16 %v186
    %v609 = vunpack.c.h.b16 %v186
    %v610 = vunpack.c.l.b16 %v187
    %v611 = vunpack.c.h.b16 %v187
    %v612 = vpack.c.b16 %v358, %v356
    %v613 = vpack.c.b16 %v359, %v357
    %v614 = vpack.c.b16 %v362, %v360
    %v615 = vpack.c.b16 %v363, %v361
    %v616 = vpack.c.b16 %v366, %v364
    %v617 = vpack.c.b16 %v367, %v365
    %v618 = vpack.c.b16 %v370, %v368
    %v619 = vpack.c.b16 %v371, %v369
    %v620 = vpack.c.b16 %v374, %v372
    %v621 = vpack.c.b16 %v375, %v373
    %v622 = vpack.c.b16 %v378, %v376
    %v623 = vpack.c.b16 %v379, %v377
    %v624 = vpack.c.b16 %v382, %v380
    %v625 = vpack.c.b16 %v383, %v381
    %v626 = vpack.c.b16 %v386, %v384
    %v627 = vpack.c.b16 %v387, %v385
    %v628 = vpack.c.b16 %v390, %v388
    %v629 = vpack.c.b16 %v391, %v389
    %v630 = vpack.c.b16 %v394, %v392
    %v631 = vpack.c.b16 %v395, %v393
    %v632 = vpack.c.b16 %v398, %v396
    %v633 = vpack.c.b16 %v399, %v397
    %v634 = vpack.c.b16 %v402, %v400
    %v635 = vpack.c.b16 %v403, %v401
    %v636 = vpack.c.b16 %v406, %v404
    %v637 = vpack.c.b16 %v407, %v405
    %v638 = vpack.c.b16 %v410, %v408
    %v639 = vpack.c.b16 %v411, %v409
    %v640 = vpack.c.b16 %v414, %v412
    %v641 = vpack.c.b16 %v415, %v413
    %v642 = vpack.c.b16 %v418, %v416
    %v643 = vpack.c.b16 %v419, %v417
    %v644 = vpack.c.b16 %v422, %v420
    %v645 = vpack.c.b16 %v423, %v421
    %v646 = vpack.c.b16 %v426, %v424
    %v647 = vpack.c.b16 %v427, %v425
    %v648 = vpack.c.b16 %v430, %v428
    %v649 = vpack.c.b16 %v431, %v429
    %v650 = vpack.c.b16 %v434, %v432
    %v651 = vpack.c.b16 %v435, %v433
    %v652 = vpack.c.b16 %v438, %v436
    %v653 = vpack.c.b16 %v439, %v437
    %v654 = vpack.c.b16 %v442, %v440
    %v655 = vpack.c.b16 %v443, %v441
    %v656 = vpack.c.b16 %v446, %v444
    %v657 = vpack.c.b16 %v447, %v445
    %v658 = vpack.c.b16 %v450, %v448
    %v659 = vpack.c.b16 %v451, %v449
    %v660 = vpack.c.b16 %v454, %v452
    %v661 = vpack.c.b16 %v455, %v453
    %v662 = vpack.c.b16 %v458, %v456
    %v663 = vpack.c.b16 %v459, %v457
    %v664 = vpack.c.b16 %v462, %v460
    %v665 = vpack.c.b16 %v463, %v461
    %v666 = vpack.c.b16 %v466, %v464
    %v667 = vpack.c.b16 %v467, %v465
    %v668 = vpack.c.b16 %v470, %v468
    %v669 = vpack.c.b16 %v471, %v469
    %v670 = vpack.c.b16 %v474, %v472
    %v671 = vpack.c.b16 %v475, %v473
    %v672 = vpack.c.b16 %v478, %v476
    %v673 = vpack.c.b16 %v479, %v477
    %v674 = vpack.c.b16 %v482, %v480
    %v675 = vpack.c.b16 %v483, %v481
    %v676 = vpack.c.b16 %v486, %v484
    %v677 = vpack.c.b16 %v487, %v485
    %v678 = vpack.c.b16 %v490, %v488
    %v679 = vpack.c.b16 %v491, %v489
    %v680 = vpack.c.b16 %v494, %v492
    %v681 = vpack.c.b16 %v495, %v493
    %v682 = vpack.c.b16 %v498, %v496
    %v683 = vpack.c.b16 %v499, %v497
    %v684 = vpack.c.b16 %v502, %v500
    %v685 = vpack.c.b16 %v503, %v501
    %v686 = vpack.c.b16 %v506, %v504
    %v687 = vpack.c.b16 %v507, %v505
    %v688 = vpack.c.b16 %v510, %v508
    %v689 = vpack.c.b16 %v511, %v509
    %v690 = vpack.c.b16 %v514, %v512
    %v691 = vpack.c.b16 %v515, %v513
    %v692 = vpack.c.b16 %v518, %v516
    %v693 = vpack.c.b16 %v519, %v517
    %v694 = vpack.c.b16 %v522, %v520
    %v695 = vpack.c.b16 %v523, %v521
    %v696 = vpack.c.b16 %v526, %v524
    %v697 = vpack.c.b16 %v527, %v525
    %v698 = vpack.c.b16 %v530, %v528
    %v699 = vpack.c.b16 %v531, %v529
    %v700 = vpack.c.b16 %v534, %v532
    %v701 = vpack.c.b16 %v535, %v533
    %v702 = vpack.c.b16 %v538, %v536
    %v703 = vpack.c.b16 %v539, %v537
    %v704 = vpack.c.b16 %v542, %v540
    %v705 = vpack.c.b16 %v543, %v541
    %v706 = vpack.c.b16 %v546, %v544
    %v707 = vpack.c.b16 %v547, %v545
    %v708 = vpack.c.b16 %v550, %v548
    %v709 = vpack.c.b16 %v551, %v549
    %v710 = vpack.c.b16 %v554, %v552
    %v711 = vpack.c.b16 %v555, %v553
    %v712 = vpack.c.b16 %v558, %v556
    %v713 = vpack.c.b16 %v559, %v557
    %v714 = vpack.c.b16 %v562, %v560
    %v715 = vpack.c.b16 %v563, %v561
    %v716 = vpack.c.b16 %v566, %v564
    %v717 = vpack.c.b16 %v567, %v565
    %v718 = vpack.c.b16 %v570, %v568
    %v719 = vpack.c.b16 %v571, %v569
    %v720 = vpack.c.b16 %v574, %v572
    %v721 = vpack.c.b16 %v575, %v573
    %v722 = vpack.c.b16 %v578, %v576
    %v723 = vpack.c.b16 %v579, %v577
    %v724 = vpack.c.b16 %v582, %v580
    %v725 = vpack.c.b16 %v583, %v581
    %v726 = vpack.c.b16 %v586, %v584
    %v727 = vpack.c.b16 %v587, %v585
    %v728 = vpack.c.b16 %v590, %v588
    %v729 = vpack.c.b16 %v591, %v589
    %v730 = vpack.c.b16 %v594, %v592
    %v731 = vpack.c.b16 %v595, %v593
    %v732 = vpack.c.b16 %v598, %v596
    %v733 = vpack.c.b16 %v599, %v597
    %v734 = vpack.c.b16 %v602, %v600
    %v735 = vpack.c.b16 %v603, %v601
    %v736 = vpack.c.b16 %v606, %v604
    %v737 = vpack.c.b16 %v607, %v605
    %v738 = vpack.c.b16 %v610, %v608
    %v739 = vpack.c.b16 %v611, %v609
    %868 = vmatprep.subr.bf16.mxu0 %v613
    %869 = vmatpush1.bf16.msra.mxu0 %v612
    %870 = vmatprep.subr.bf16.mxu0 %v615
    %871 = vmatpush1.bf16.msra.mxu0 %v614
    %872 = vmatprep.subr.bf16.mxu0 %v617
    %873 = vmatpush1.bf16.msra.mxu0 %v616
    %874 = vmatprep.subr.bf16.mxu0 %v619
    %875 = vmatpush1.bf16.msra.mxu0 %v618
    %876 = vmatprep.subr.bf16.mxu0 %v621
    %877 = vmatpush1.bf16.msra.mxu0 %v620
    %878 = vmatprep.subr.bf16.mxu0 %v623
    %879 = vmatpush1.bf16.msra.mxu0 %v622
    %880 = vmatprep.subr.bf16.mxu0 %v625
    %881 = vmatpush1.bf16.msra.mxu0 %v624
    %882 = vmatprep.subr.bf16.mxu0 %v627
    %883 = vmatpush1.bf16.msra.mxu0 %v626
    %884 = vmatprep.subr.bf16.mxu0 %v629
    %885 = vmatpush1.bf16.msra.mxu0 %v628
    %886 = vmatprep.subr.bf16.mxu0 %v631
    %887 = vmatpush1.bf16.msra.mxu0 %v630
    %888 = vmatprep.subr.bf16.mxu0 %v633
    %889 = vmatpush1.bf16.msra.mxu0 %v632
    %890 = vmatprep.subr.bf16.mxu0 %v635
    %891 = vmatpush1.bf16.msra.mxu0 %v634
    %892 = vmatprep.subr.bf16.mxu0 %v637
    %893 = vmatpush1.bf16.msra.mxu0 %v636
    %894 = vmatprep.subr.bf16.mxu0 %v639
    %895 = vmatpush1.bf16.msra.mxu0 %v638
    %896 = vmatprep.subr.bf16.mxu0 %v641
    %897 = vmatpush1.bf16.msra.mxu0 %v640
    %898 = vmatprep.subr.bf16.mxu0 %v643
    %899 = vmatpush1.bf16.msra.mxu0 %v642
    %900 = vmatprep.mubr.bf16.mxu0 %v213
    %901 = vmatmul.mubr.bf16.gmra.mrb[0].mxu0 %v212
    %v902 = vpop.f32.mrb[0].mxu0
    %v903 = vadd.f32 0.0, %v902
    %v904 = vpop.f32.mrb[0].mxu0
    %v905 = vadd.f32 0.0, %v904
    %v906 = vpop.f32.mrb[0].mxu0
    %v907 = vadd.f32 0.0, %v906
    %v908 = vpop.f32.mrb[0].mxu0
    %v909 = vadd.f32 0.0, %v908
    %910 = vdwg.mxu0
    %911 = vmatprep.subr.bf16.mxu0 %v645
    %912 = vmatpush1.bf16.msra.mxu0 %v644
    %913 = vmatprep.subr.bf16.mxu0 %v647
    %914 = vmatpush1.bf16.msra.mxu0 %v646
    %915 = vmatprep.subr.bf16.mxu0 %v649
    %916 = vmatpush1.bf16.msra.mxu0 %v648
    %917 = vmatprep.subr.bf16.mxu0 %v651
    %918 = vmatpush1.bf16.msra.mxu0 %v650
    %919 = vmatprep.subr.bf16.mxu0 %v653
    %920 = vmatpush1.bf16.msra.mxu0 %v652
    %921 = vmatprep.subr.bf16.mxu0 %v655
    %922 = vmatpush1.bf16.msra.mxu0 %v654
    %923 = vmatprep.subr.bf16.mxu0 %v657
    %924 = vmatpush1.bf16.msra.mxu0 %v656
    %925 = vmatprep.subr.bf16.mxu0 %v659
    %926 = vmatpush1.bf16.msra.mxu0 %v658
    %927 = vmatprep.subr.bf16.mxu0 %v661
    %928 = vmatpush1.bf16.msra.mxu0 %v660
    %929 = vmatprep.subr.bf16.mxu0 %v663
    %930 = vmatpush1.bf16.msra.mxu0 %v662
    %931 = vmatprep.subr.bf16.mxu0 %v665
    %932 = vmatpush1.bf16.msra.mxu0 %v664
    %933 = vmatprep.subr.bf16.mxu0 %v667
    %934 = vmatpush1.bf16.msra.mxu0 %v666
    %935 = vmatprep.subr.bf16.mxu0 %v669
    %936 = vmatpush1.bf16.msra.mxu0 %v668
    %937 = vmatprep.subr.bf16.mxu0 %v671
    %938 = vmatpush1.bf16.msra.mxu0 %v670
    %939 = vmatprep.subr.bf16.mxu0 %v673
    %940 = vmatpush1.bf16.msra.mxu0 %v672
    %941 = vmatprep.subr.bf16.mxu0 %v675
    %942 = vmatpush1.bf16.msra.mxu0 %v674
    %943 = vmatprep.mubr.bf16.mxu0 %v215
    %944 = vmatmul.mubr.bf16.gmra.mrb[0].mxu0 %v214
    %v945 = vpop.f32.mrb[0].mxu0
    %v946 = vadd.f32 %v903, %v945
    %v947 = vpop.f32.mrb[0].mxu0
    %v948 = vadd.f32 %v905, %v947
    %v949 = vpop.f32.mrb[0].mxu0
    %v950 = vadd.f32 %v907, %v949
    %v951 = vpop.f32.mrb[0].mxu0
    %v952 = vadd.f32 %v909, %v951
    %953 = vdwg.mxu0
    %954 = vmatprep.subr.bf16.mxu0 %v677
    %955 = vmatpush1.bf16.msra.mxu0 %v676
    %956 = vmatprep.subr.bf16.mxu0 %v679
    %957 = vmatpush1.bf16.msra.mxu0 %v678
    %958 = vmatprep.subr.bf16.mxu0 %v681
    %959 = vmatpush1.bf16.msra.mxu0 %v680
    %960 = vmatprep.subr.bf16.mxu0 %v683
    %961 = vmatpush1.bf16.msra.mxu0 %v682
    %962 = vmatprep.subr.bf16.mxu0 %v685
    %963 = vmatpush1.bf16.msra.mxu0 %v684
    %964 = vmatprep.subr.bf16.mxu0 %v687
    %965 = vmatpush1.bf16.msra.mxu0 %v686
    %966 = vmatprep.subr.bf16.mxu0 %v689
    %967 = vmatpush1.bf16.msra.mxu0 %v688
    %968 = vmatprep.subr.bf16.mxu0 %v691
    %969 = vmatpush1.bf16.msra.mxu0 %v690
    %970 = vmatprep.subr.bf16.mxu0 %v693
    %971 = vmatpush1.bf16.msra.mxu0 %v692
    %972 = vmatprep.subr.bf16.mxu0 %v695
    %973 = vmatpush1.bf16.msra.mxu0 %v694
    %974 = vmatprep.subr.bf16.mxu0 %v697
    %975 = vmatpush1.bf16.msra.mxu0 %v696
    %976 = vmatprep.subr.bf16.mxu0 %v699
    %977 = vmatpush1.bf16.msra.mxu0 %v698
    %978 = vmatprep.subr.bf16.mxu0 %v701
    %979 = vmatpush1.bf16.msra.mxu0 %v700
    %980 = vmatprep.subr.bf16.mxu0 %v703
    %981 = vmatpush1.bf16.msra.mxu0 %v702
    %982 = vmatprep.subr.bf16.mxu0 %v705
    %983 = vmatpush1.bf16.msra.mxu0 %v704
    %984 = vmatprep.subr.bf16.mxu0 %v707
    %985 = vmatpush1.bf16.msra.mxu0 %v706
    %986 = vmatprep.mubr.bf16.mxu0 %v217
    %987 = vmatmul.mubr.bf16.gmra.mrb[0].mxu0 %v216
    %v988 = vpop.f32.mrb[0].mxu0
    %v989 = vadd.f32 %v946, %v988
    %v990 = vpop.f32.mrb[0].mxu0
    %v991 = vadd.f32 %v948, %v990
    %v992 = vpop.f32.mrb[0].mxu0
    %v993 = vadd.f32 %v950, %v992
    %v994 = vpop.f32.mrb[0].mxu0
    %v995 = vadd.f32 %v952, %v994
    %996 = vdwg.mxu0
    %997 = vmatprep.subr.bf16.mxu0 %v709
    %998 = vmatpush1.bf16.msra.mxu0 %v708
    %999 = vmatprep.subr.bf16.mxu0 %v711
    %1000 = vmatpush1.bf16.msra.mxu0 %v710
    %1001 = vmatprep.subr.bf16.mxu0 %v713
    %1002 = vmatpush1.bf16.msra.mxu0 %v712
    %1003 = vmatprep.subr.bf16.mxu0 %v715
    %1004 = vmatpush1.bf16.msra.mxu0 %v714
    %1005 = vmatprep.subr.bf16.mxu0 %v717
    %1006 = vmatpush1.bf16.msra.mxu0 %v716
    %1007 = vmatprep.subr.bf16.mxu0 %v719
    %1008 = vmatpush1.bf16.msra.mxu0 %v718
    %1009 = vmatprep.subr.bf16.mxu0 %v721
    %1010 = vmatpush1.bf16.msra.mxu0 %v720
    %1011 = vmatprep.subr.bf16.mxu0 %v723
    %1012 = vmatpush1.bf16.msra.mxu0 %v722
    %1013 = vmatprep.subr.bf16.mxu0 %v725
    %1014 = vmatpush1.bf16.msra.mxu0 %v724
    %1015 = vmatprep.subr.bf16.mxu0 %v727
    %1016 = vmatpush1.bf16.msra.mxu0 %v726
    %1017 = vmatprep.subr.bf16.mxu0 %v729
    %1018 = vmatpush1.bf16.msra.mxu0 %v728
    %1019 = vmatprep.subr.bf16.mxu0 %v731
    %1020 = vmatpush1.bf16.msra.mxu0 %v730
    %1021 = vmatprep.subr.bf16.mxu0 %v733
    %1022 = vmatpush1.bf16.msra.mxu0 %v732
    %1023 = vmatprep.subr.bf16.mxu0 %v735
    %1024 = vmatpush1.bf16.msra.mxu0 %v734
    %1025 = vmatprep.subr.bf16.mxu0 %v737
    %1026 = vmatpush1.bf16.msra.mxu0 %v736
    %1027 = vmatprep.subr.bf16.mxu0 %v739
    %1028 = vmatpush1.bf16.msra.mxu0 %v738
    %1029 = vmatprep.mubr.bf16.mxu0 %v219
    %1030 = vmatmul.mubr.bf16.gmra.mrb[0].mxu0 %v218
    %v1031 = vpop.f32.mrb[0].mxu0
    %v1032 = vadd.f32 %v989, %v1031
    %v1033 = vpop.f32.mrb[0].mxu0
    %v1034 = vadd.f32 %v991, %v1033
    %v1035 = vpop.f32.mrb[0].mxu0
    %v1036 = vadd.f32 %v993, %v1035
    %v1037 = vpop.f32.mrb[0].mxu0
    %v1038 = vadd.f32 %v995, %v1037
    %1039 = vdwg.mxu0
    %v1040 = vadd.f32 %v48, %v1032
    %v1041 = vadd.f32 %v49, %v1034
    %v1042 = vadd.f32 %v50, %v1036
    %v1043 = vadd.f32 %v51, %v1038
    %1044 = vst [vmem:[#allocation2] sm:$0xff] %v1040
    %1045 = vst [vmem:[#allocation2 + $0x8] sm:$0xff] %v1041
    %1046 = vst [vmem:[#allocation2 + $0x10] sm:$0xff] %v1042
    %1047 = vst [vmem:[#allocation2 + $0x18] sm:$0xff] %v1043
    // Predicated region
    $region22: #{tpu_custom_call.1} parent=1 // pred_check
      %p1048 = pneg %p40
    $region23: #{tpu_custom_call.1} parent=1 // pred_check_branch
      %1050 = sbr.rel (%p1048) target = $region25
    $region24: #{tpu_custom_call.1} parent=1 // pred_region
      %v1051 = vld [vmem:[#allocation2] sm:$0xff]
      %v1052 = vld [vmem:[#allocation2 + $0x8] sm:$0xff]
      %v1053 = vld [vmem:[#allocation2 + $0x10] sm:$0xff]
      %v1054 = vld [vmem:[#allocation2 + $0x18] sm:$0xff]
      %v1055 = vmax.f32 %v1051, 0.0
      %v1056 = vmax.f32 %v1052, 0.0
      %v1057 = vmax.f32 %v1053, 0.0
      %v1058 = vmax.f32 %v1054, 0.0
      %v1059 = vpack.c.bf16 %v1057, %v1055
      %v1060 = vpack.c.bf16 %v1058, %v1056
      %v1063 = vunpack.c.l.b16 %v1059
      %v1064 = vunpack.c.l.b16 %v1060
      %v1065 = vunpack.c.h.b16 %v1059
      %v1066 = vunpack.c.h.b16 %v1060
      %v1067 = vpack.c.b16 %v1064, %v1063
      %v1068 = vpack.c.b16 %v1066, %v1065
      %1071 = vst [vmem:[#allocation8] sm:$0xff] %v1067
      %1072 = vst [vmem:[#allocation8 + $0x8] sm:$0xff] %v1068
    $region25: #{tpu_custom_call.1} parent=1 // pred_fallthru
      _
    // Predicated region
    $region26: #{tpu_custom_call.1} parent=1 // pred_check
      _
    $region27: #{tpu_custom_call.1} parent=1 // pred_check_branch
      %1074 = sbr.rel (0) target = $region29
    $region28: #{tpu_custom_call.1} parent=1 // pred_region
      %s1076 = ssub.s32 256, 256
      %1077 = vsyncadd [#allocation5], %s1076
      %s1078 = sshll.u32 [#allocation8], 4
      %s1079 = int_to_ptr.vmem [resolvable:$true] %s1078
      %1084 = dma.vmem_to_hbm [thread:$0]  %s1079, 256, %s2, [#allocation5], 128, 128, 8
    $region29: #{tpu_custom_call.1} parent=1 // pred_fallthru
      _
    // Predicated region
    $region30: #{tpu_custom_call.1} parent=1 // pred_check
      _
    $region31: #{tpu_custom_call.1} parent=1 // pred_check_branch
      %1086 = sbr.rel (0) target = $region33
    $region32: #{tpu_custom_call.1} parent=1 // pred_region
      %1087 = dma.done [#allocation5], 256
    $region33: #{tpu_custom_call.1} parent=1 // pred_fallthru
      _
    %1088 = vsyncpa [#allocation4], 1
    %1089 = vsyncpa [#allocation7], 1
    %1090 = vsyncpa [#allocation5], 1

</llo_original>
